<compile_context>
chip_gen: v7x
topology: tpu7x:2x2x1
jax: 0.10.0
libtpu: 0.0.40
codegen_flags: <defaults>
</compile_context>

<pallas_src>
import math
from functools import partial

import numpy as np
import jax
import jax.numpy as jnp
from jax.experimental import pallas as pl
from jax.experimental.pallas import tpu as pltpu


def _round_up(x, m):
    return -(-x // m) * m


def _make_cfg(c_in, c_out, k, s, t, mrows):
    p = -(-k // s)                       # taps after stride regrouping
    g = _round_up(p + t - 1, t)          # phase-extended tap window (multiple of t)
    cs = c_in * s
    assert t % 2 == 0
    assert (t * cs) % 128 == 0, "lane width of one phase slab must be 128-aligned"
    assert mrows % 8 == 0
    return dict(c_in=c_in, c_out=c_out, k=k, s=s, t=t, g=g, cs=cs, mrows=mrows)


# conv0..conv3 of the PyTorch model.  t (phases per matmul row) is chosen so that the
# matmul N = t*c_out is 256..768 lanes, t*cs is a multiple of 128, and the im2col-style
# input duplication g/t stays small; mrows is the packed-row tile height.
LAYER_CFGS = [
    _make_cfg(c_in=1,  c_out=8,  k=5000, s=10, t=64, mrows=256),   # N=512, K=5760, dup 9
    _make_cfg(c_in=8,  c_out=32, k=1000, s=20, t=8,  mrows=200),   # N=256, K=10240, dup 8
    _make_cfg(c_in=32, c_out=48, k=50,   s=2,  t=16, mrows=256),   # N=768, K=3072,  dup 3
    _make_cfg(c_in=48, c_out=64, k=5,    s=2,  t=4,  mrows=128),   # N=256, K=768,   dup 2
]


# --------------------------- one-time weight packing (hoisted) ---------------------------

def _pack_conv_weights(w, b, cfg):
    """(C_out, C_in, K) torch conv weight -> (G*CS, T*C_out) phase-packed matmul RHS."""
    c_out, c_in, k = w.shape
    s, t, g, cs = cfg["s"], cfg["t"], cfg["g"], cfg["cs"]
    p = -(-k // s)
    w_pad = jnp.pad(w.astype(jnp.float32), ((0, 0), (0, 0), (0, p * s - k)))
    # WB[p, c*s + r, o] = w[o, c, p*s + r]
    wb = w_pad.reshape(c_out, c_in, p, s).transpose(2, 1, 3, 0).reshape(p, cs, c_out)
    # Wpk[u, q, cb, o] = WB[u - phase(cb), q, o]; column block cb = (ph%2)*(T/2) + ph//2,
    # so the pooling pairs (phases 2r', 2r'+1) are the two contiguous lane halves.
    wpk4 = jnp.zeros((g, cs, t, c_out), jnp.float32)
    for ph in range(t):
        cb = (ph % 2) * (t // 2) + ph // 2
        wpk4 = wpk4.at[ph:ph + p, :, cb, :].set(wb)
    wpk = wpk4.reshape(g * cs, t * c_out).astype(jnp.bfloat16)
    b_pk = jnp.tile(b.astype(jnp.float32), t).reshape(1, t * c_out)
    return wpk, b_pk


def pack_params(p):
    """One-time packing of all weights into kernel-ready layouts (out of the hot path)."""
    convs = tuple(_pack_conv_weights(p[f"w{i}"], p[f"b{i}"], cfg)
                  for i, cfg in enumerate(LAYER_CFGS))
    fc = (p["fw1"].astype(jnp.bfloat16), p["fb1"].reshape(1, -1).astype(jnp.float32),
          p["fw2"].astype(jnp.bfloat16), p["fb2"].reshape(1, -1).astype(jnp.float32),
          p["fw3"].astype(jnp.bfloat16), p["fb3"].reshape(1, -1).astype(jnp.float32))
    return {"convs": convs, "fc": fc}


# --------------- fused Conv1d + bias + ReLU + MaxPool1d(2,2,ceil) kernel ----------------

def _conv_relu_pool_kernel(xd_ref, w_ref, b_ref, thr_ref, o_ref, *, mrows, half):
    # xd_ref : (mrows, G*CS)   bf16  phase-decimated input rows (one block per tile)
    # w_ref  : (G*CS, T*C_out) bf16  phase-packed weights (constant block, DMA'd once)
    # b_ref  : (1, T*C_out)    f32   bias tiled over phases
    # thr_ref: (1, T*C_out)    i32   per-lane count of valid packed rows (tail masking)
    # o_ref  : (mrows, (T/2)*C_out) f32  pooled output (packed, lane dense)
    z = jnp.dot(xd_ref[...], w_ref[...], preferred_element_type=jnp.float32)
    y = jnp.maximum(z + b_ref[...], 0.0)                      # bias + ReLU fused
    # Zero lanes whose conv row is >= L_out so the fused ceil-mode pool never mixes
    # garbage into a valid pair (post-ReLU values are >= 0, so 0 acts as -inf).
    row = pl.program_id(0) * mrows + jax.lax.broadcasted_iota(jnp.int32, y.shape, 0)
    y = jnp.where(row < thr_ref[...], y, 0.0)
    # MaxPool1d(kernel=2, stride=2, ceil_mode=True): by construction of the weight
    # column order, the pool pairs are the two contiguous lane halves.
    o_ref[...] = jnp.maximum(y[:, :half], y[:, half:])


def conv_relu_pool(x_tc, wpk, b_pk, cfg):
    """maxpool2_ceil(relu(Conv1d(x, w, b, stride=s, padding=1))) as one matmul per tile.

    x_tc: (L_in, C_in) f32.  Returns (L_pool, C_out) f32.
    """
    s, k, t, g, cs, mrows = cfg["s"], cfg["k"], cfg["t"], cfg["g"], cfg["cs"], cfg["mrows"]
    c_in, c_out = cfg["c_in"], cfg["c_out"]
    l_in = x_tc.shape[0]
    assert x_tc.shape[1] == c_in
    pad = 1
    l_out = (l_in + 2 * pad - k) // s + 1
    l_pool = (l_out + 1) // 2

    n_packed = -(-l_out // t)                        # matmul rows (T conv rows each)
    mrows_eff = min(mrows, _round_up(n_packed, 8))
    n_tiles = -(-n_packed // mrows_eff)
    cap = n_tiles * mrows_eff

    # ---- glue: stride-blocked input, duplicated G/T x into phase-decimated rows ----
    nb = t * cap + (g - t)                           # narrow stride-blocked rows needed
    assert nb * s >= l_in + 2
    xp = jnp.pad(x_tc, ((pad, nb * s - l_in - pad), (0, 0)))
    xb = (xp.reshape(nb, s, c_in).transpose(0, 2, 1).reshape(nb, cs)).astype(jnp.bfloat16)
    # XD[i, (w*t + u')*cs + q] = XB[t*i + w*t + u', q]  (each slab reshape is free)
    xd = jnp.concatenate(
        [xb[w * t: w * t + cap * t].reshape(cap, t * cs) for w in range(g // t)], axis=1)
    # TODO(synk): the G/T-fold duplication could be removed entirely by DMA-ing the
    # narrow XB and widening in VMEM, at the cost of unaligned sublane shifts in-kernel.

    # Per-lane number of valid packed rows (static): lane -> conv-row phase -> threshold.
    cb = np.arange(t * c_out) // c_out
    ph = 2 * (cb % (t // 2)) + cb // (t // 2)
    thr = jnp.asarray(((l_out - 1 - ph) // t + 1).clip(min=0).reshape(1, t * c_out),
                      dtype=jnp.int32)

    half = (t // 2) * c_out
    gcs = g * cs
    out = pl.pallas_call(
        partial(_conv_relu_pool_kernel, mrows=mrows_eff, half=half),
        out_shape=jax.ShapeDtypeStruct((cap, half), jnp.float32),
        grid_spec=pltpu.PrefetchScalarGridSpec(
            num_scalar_prefetch=0,
            grid=(n_tiles,),
            in_specs=[
                pl.BlockSpec((mrows_eff, gcs), lambda i: (i, 0)),
                pl.BlockSpec((gcs, t * c_out), lambda i: (0, 0)),    # resident weights
                pl.BlockSpec((1, t * c_out), lambda i: (0, 0)),
                pl.BlockSpec((1, t * c_out), lambda i: (0, 0)),
            ],
            out_specs=pl.BlockSpec((mrows_eff, half), lambda i: (i, 0)),
        ),
        compiler_params=pltpu.CompilerParams(
            dimension_semantics=("parallel",),        # disjoint tiles; feeds v7x's 2 TCs
            vmem_limit_bytes=32 * 1024 * 1024,        # ~20 MB used; safe on v7x (64 MiB)
        ),
    )(xd, wpk, b_pk, thr)
    # Packed rows are time-major / channel-minor, so this reshape is a free bitcast.
    return out.reshape(cap * (t // 2), c_out)[:l_pool, :]


# ------------------------------------ FC head kernel -----------------------------------

def _fc_kernel(x_ref, w1_ref, b1_ref, w2_ref, b2_ref, w3_ref, b3_ref, o_ref):
    h = jnp.dot(x_ref[...], w1_ref[...], preferred_element_type=jnp.float32) + b1_ref[...]
    h = jnp.maximum(h, 0.0)
    h = jnp.dot(h.astype(jnp.bfloat16), w2_ref[...],
                preferred_element_type=jnp.float32) + b2_ref[...]
    h = jnp.maximum(h, 0.0)
    o_ref[...] = jnp.dot(h.astype(jnp.bfloat16), w3_ref[...],
                         preferred_element_type=jnp.float32) + b3_ref[...]


def fc_head(x_flat, w1, b1, w2, b2, w3, b3):
    x2 = x_flat.reshape(1, -1).astype(jnp.bfloat16)
    n_out = w3.shape[1]
    args = (x2, w1, b1, w2, b2, w3, b3)
    in_specs = [pl.BlockSpec(a.shape, lambda i: (0, 0)) for a in args]
    out = pl.pallas_call(
        _fc_kernel,
        out_shape=jax.ShapeDtypeStruct((1, n_out), jnp.float32),
        grid_spec=pltpu.PrefetchScalarGridSpec(
            num_scalar_prefetch=0,
            grid=(1,),
            in_specs=in_specs,
            out_specs=pl.BlockSpec((1, n_out), lambda i: (0, 0)),
        ),
        compiler_params=pltpu.CompilerParams(
            dimension_semantics=("arbitrary",),
            vmem_limit_bytes=32 * 1024 * 1024,
        ),
    )(*args)
    return out.reshape(n_out)


# ------------------------------------- Forward pass ------------------------------------

def complex_cnn_forward(x, packed):
    # x: (1, 1, L) like PyTorch NCW; batch must be 1 (the model flattens with view(-1)).
    h = x[0].T.astype(jnp.float32)                                   # (L, 1)
    for cfg, (wpk, b_pk) in zip(LAYER_CFGS, packed["convs"]):
        h = conv_relu_pool(h, wpk, b_pk, cfg)                        # Dropout(0.0) = id
    # TODO(synk): conv2/conv3/FC could be fused into one resident pallas_call; they are
    # microsecond-scale so kept as separate calls for clarity.
    flat = h.T.reshape(-1)                     # torch view(-1): channel-major (64 * 190)
    return fc_head(flat, *packed["fc"])


# ---------------------------------- Deterministic init ---------------------------------

def init_params(key, output_size=1):
    ks = jax.random.split(key, 14)

    def u(k, shape, fan_in):
        bound = 1.0 / math.sqrt(fan_in)
        return jax.random.uniform(k, shape, jnp.float32, -bound, bound)

    p = {}
    p["w0"] = u(ks[0], (8, 1, 5000), 5000);        p["b0"] = u(ks[1], (8,), 5000)
    p["w1"] = u(ks[2], (32, 8, 1000), 8000);       p["b1"] = u(ks[3], (32,), 8000)
    p["w2"] = u(ks[4], (48, 32, 50), 1600);        p["b2"] = u(ks[5], (48,), 1600)
    p["w3"] = u(ks[6], (64, 48, 5), 240);          p["b3"] = u(ks[7], (64,), 240)
    # Linear weights stored as (in, out); y = x @ W + b  (== torch Linear with W = W_t.T)
    p["fw1"] = u(ks[8], (12160, 32), 12160);       p["fb1"] = u(ks[9], (32,), 12160)
    p["fw2"] = u(ks[10], (32, 16), 32);            p["fb2"] = u(ks[11], (16,), 32)
    p["fw3"] = u(ks[12], (16, output_size), 16);   p["fb3"] = u(ks[13], (output_size,), 16)
    return p


# --------------------------- pure-JAX reference for parity test ------------------------

def _ref_conv_relu_pool(x_tc, w, b, s):
    l_in, c_in = x_tc.shape
    c_out, _, k = w.shape
    xp = jnp.pad(x_tc, ((1, 1), (0, 0)))
    l_out = (l_in + 2 - k) // s + 1
    idx = jnp.arange(l_out)[:, None] * s + jnp.arange(k)[None, :]
    patches = xp[idx]                                                 # (L_out, K, C_in)
    y = jnp.einsum("lkc,ock->lo", patches, w,
                   precision=jax.lax.Precision.HIGHEST) + b[None, :]
    y = jnp.maximum(y, 0.0)
    l_pool = (l_out + 1) // 2
    y = jnp.pad(y, ((0, 2 * l_pool - l_out), (0, 0)), constant_values=-jnp.inf)
    return jnp.max(y.reshape(l_pool, 2, c_out), axis=1)


if __name__ == "__main__":
    key = jax.random.PRNGKey(0)
    k_x, k_p, k_tx, k_tw, k_tb = jax.random.split(key, 5)

    # --- small-shape parity check of the fused conv+relu+pool kernel (odd L_out) ---
    test_cfg = _make_cfg(c_in=4, c_out=32, k=100, s=4, t=8, mrows=64)
    xt = jax.random.normal(k_tx, (2994, 4), jnp.float32)
    wt = jax.random.uniform(k_tw, (32, 4, 100), jnp.float32, -0.05, 0.05)
    bt = jax.random.uniform(k_tb, (32,), jnp.float32, -0.05, 0.05)
    wpk_t, bpk_t = _pack_conv_weights(wt, bt, test_cfg)
    got = conv_relu_pool(xt, wpk_t, bpk_t, test_cfg)
    ref = _ref_conv_relu_pool(xt, wt, bt, s=4)
    assert got.shape == ref.shape, (got.shape, ref.shape)
    err = float(jnp.max(jnp.abs(got - ref)))
    scale = float(jnp.max(jnp.abs(ref))) + 1e-6
    assert err <= 3e-2 * scale, f"conv kernel parity failed: err={err}, scale={scale}"

    # --- full model: fc1 expects 12160 = 64 ch * 190 steps => L = 2_500_000 samples ---
    L = 2_500_000
    x = jax.random.normal(k_x, (1, 1, L), dtype=jnp.float32)
    params = init_params(k_p, output_size=1)
    packed = jax.jit(pack_params)(params)           # weight re-blocking done once

    fwd = jax.jit(complex_cnn_forward)
    out = jax.block_until_ready(fwd(x, packed))

    assert out.shape == (1,), out.shape
    assert bool(jnp.all(jnp.isfinite(out)))
    print("KERNEL_OK")
</pallas_src>

<mosaic_0001>
module attributes {stable_mosaic.version = 11 : i64} {
  func.func @_conv_relu_pool_kernel(%arg0: i32, %arg1: memref<64x512xbf16, #tpu.memory_space<vmem>>, %arg2: memref<512x256xbf16, #tpu.memory_space<vmem>>, %arg3: memref<1x256xf32, #tpu.memory_space<vmem>>, %arg4: memref<1x256xi32, #tpu.memory_space<vmem>>, %arg5: memref<64x128xf32, #tpu.memory_space<vmem>>) attributes {dimension_semantics = [#tpu.dimension_semantics<parallel>], iteration_bounds = array<i64: 2>, scalar_prefetch = 0 : i64, scratch_operands = 0 : i64, tpu.core_type = #tpu.core_type<tc>, window_params = [{transform_indices = @transform_0, window_bounds = array<i64: 64, 512>}, {pipeline_mode = #tpu.pipeline_mode<synchronous>, transform_indices = @transform_1, window_bounds = array<i64: 512, 256>}, {pipeline_mode = #tpu.pipeline_mode<synchronous>, transform_indices = @transform_2, window_bounds = array<i64: 1, 256>}, {pipeline_mode = #tpu.pipeline_mode<synchronous>, transform_indices = @transform_3, window_bounds = array<i64: 1, 256>}, {transform_indices = @transform_4, window_bounds = array<i64: 64, 128>}]} {
    %c0 = arith.constant 0 : index
    %c0_0 = arith.constant 0 : index
    %0 = vector.load %arg1[%c0, %c0_0] : memref<64x512xbf16, #tpu.memory_space<vmem>>, vector<64x512xbf16>
    %c0_1 = arith.constant 0 : index
    %c0_2 = arith.constant 0 : index
    %1 = vector.load %arg2[%c0_1, %c0_2] : memref<512x256xbf16, #tpu.memory_space<vmem>>, vector<512x256xbf16>
    %cst = arith.constant dense<0.000000e+00> : vector<64x256xf32>
    %2 = tpu.matmul %0, %1, %cst {dimension_numbers = #tpu.dot_dimension_numbers<[1], [0], [0], [1], [0, 0, 1, 1], [], []>} : vector<64x512xbf16>, vector<512x256xbf16>, vector<64x256xf32> -> vector<64x256xf32>
    %c0_3 = arith.constant 0 : index
    %c0_4 = arith.constant 0 : index
    %3 = vector.load %arg3[%c0_3, %c0_4] : memref<1x256xf32, #tpu.memory_space<vmem>>, vector<1x256xf32>
    %4 = vector.broadcast %3 : vector<1x256xf32> to vector<64x256xf32>
    %5 = arith.addf %2, %4 : vector<64x256xf32>
    %cst_5 = arith.constant 0.000000e+00 : f32
    %6 = vector.broadcast %cst_5 : f32 to vector<64x256xf32>
    %7 = arith.maximumf %5, %6 : vector<64x256xf32>
    %c64_i32 = arith.constant 64 : i32
    %8 = arith.muli %arg0, %c64_i32 : i32
    %9 = tpu.iota {dimensions = array<i32: 0>} : vector<64x256xi32>
    %10 = vector.broadcast %8 : i32 to vector<64x256xi32>
    %11 = arith.addi %10, %9 : vector<64x256xi32>
    %c0_6 = arith.constant 0 : index
    %c0_7 = arith.constant 0 : index
    %12 = vector.load %arg4[%c0_6, %c0_7] : memref<1x256xi32, #tpu.memory_space<vmem>>, vector<1x256xi32>
    %13 = vector.broadcast %12 : vector<1x256xi32> to vector<64x256xi32>
    %14 = arith.cmpi slt, %11, %13 : vector<64x256xi32>
    %cst_8 = arith.constant 0.000000e+00 : f32
    %15 = vector.broadcast %cst_8 : f32 to vector<64x256xf32>
    %16 = arith.select %14, %7, %15 : vector<64x256xi1>, vector<64x256xf32>
    %17 = vector.extract_strided_slice %16 {offsets = [0, 0], sizes = [64, 128], strides = [1, 1]} : vector<64x256xf32> to vector<64x128xf32>
    %18 = vector.extract_strided_slice %16 {offsets = [0, 128], sizes = [64, 128], strides = [1, 1]} : vector<64x256xf32> to vector<64x128xf32>
    %19 = arith.maximumf %17, %18 : vector<64x128xf32>
    %c0_9 = arith.constant 0 : index
    %c0_10 = arith.constant 0 : index
    %20 = vector.load %arg5[%c0_9, %c0_10] : memref<64x128xf32, #tpu.memory_space<vmem>>, vector<64x128xf32>
    tpu.vector_store %arg5[%c0_9, %c0_10], %19 {strides = array<i32>} : memref<64x128xf32, #tpu.memory_space<vmem>>, vector<64x128xf32>,
    return
  }
  func.func @transform_0(%arg0: i32) -> (i32, i32) {
    %c0_i32 = arith.constant 0 : i32
    %c0_i32_0 = arith.constant 0 : i32
    return %arg0, %c0_i32 : i32, i32
  }
  func.func @transform_1(%arg0: i32) -> (i32, i32) {
    %c0_i32 = arith.constant 0 : i32
    %c0_i32_0 = arith.constant 0 : i32
    %c0_i32_1 = arith.constant 0 : i32
    return %c0_i32, %c0_i32_0 : i32, i32
  }
  func.func @transform_2(%arg0: i32) -> (i32, i32) {
    %c0_i32 = arith.constant 0 : i32
    %c0_i32_0 = arith.constant 0 : i32
    %c0_i32_1 = arith.constant 0 : i32
    return %c0_i32, %c0_i32_0 : i32, i32
  }
  func.func @transform_3(%arg0: i32) -> (i32, i32) {
    %c0_i32 = arith.constant 0 : i32
    %c0_i32_0 = arith.constant 0 : i32
    %c0_i32_1 = arith.constant 0 : i32
    return %c0_i32, %c0_i32_0 : i32, i32
  }
  func.func @transform_4(%arg0: i32) -> (i32, i32) {
    %c0_i32 = arith.constant 0 : i32
    %c0_i32_0 = arith.constant 0 : i32
    return %arg0, %c0_i32 : i32, i32
  }
}

</mosaic_0001>

<llo_original>
// kernel: tpu_custom_call.1
$region0: #{tpu_custom_call.1}
  #allocation0 [shape = 'u32[]', space=smem, size = 0x4, offset = 0x4, fixed_abs, tag = 'smem constant byte address 0x4 - core index']
  #allocation1 [shape = 'u32[144,128]{1,0:T(1,128)}', space=vmem, size = 0x12000, scoped, tag = 'internal scratch']
  %s0 = inlined_call_operand.hbm [shape: bf16[128,512], index: 0, kind: input, shape index: {}]
  %s1 = inlined_call_operand.hbm [shape: bf16[512,256], index: 1, kind: input, shape index: {}]
  %s2 = inlined_call_operand.vmem [shape: f32[1,256], index: 2, kind: input, shape index: {}]
  %s3 = inlined_call_operand.vmem [shape: s32[1,256], index: 3, kind: input, shape index: {}]
  %s4 = inlined_call_operand.hbm [shape: f32[128,128], index: 4, kind: output, shape index: {}]
  %s5 = sld [smem:[#allocation0]]
  $region57: #{tpu_custom_call.1} parent=0
    _
  %s7 = ssub.s32 1, %s5
  %s8 = scalar_select 0, %s7, %s5
  $region1: #{tpu_custom_call.1} parent=0
    #allocation2 [shape = 'u8[131072]{0}', space=vmem, size = 0x20000, scoped, tag = 'input window, operand 0']
    #allocation3 [shape = 's32[2]{0}', space=sflag, size = 0x8, scoped, tag = 'scoped memory for tpu_custom_call.1']
    #allocation4 [shape = 's32[2]{0}', space=sflag, size = 0x8, scoped, tag = 'scoped memory for tpu_custom_call.1']
    #allocation5 [shape = 'u8[262144]{0}', space=vmem, size = 0x40000, scoped, tag = 'input window, operand 1, single buffered']
    #allocation6 [shape = 's32[1]{0}', space=sflag, size = 0x4, scoped, tag = 'scoped memory for tpu_custom_call.1']
    #allocation7 [shape = 'u8[65536]{0}', space=vmem, size = 0x10000, scoped, tag = 'output window, operand 0']
    %9 = vsyncpa [#allocation3], 0
    %s10 = scalar_lea.sflag [#allocation3], 1
    %11 = vsyncpa %s10, 0
    %12 = vsyncpa [#allocation6], 0
    %13 = vsyncpa [#allocation4], 0
    %s14 = scalar_lea.sflag [#allocation4], 1
    %15 = vsyncpa %s14, 0
    loop: start=0, step=1, limit=4
    $region2: #{tpu_custom_call.1} parent=1 // loop_pre_header
      _
    $region3: #{tpu_custom_call.1} parent=1 // loop_header
      %s17 = sphi 0, %s21
      %p18 = scmp.ge.s32.totalorder %s17, 4
      %s27 = sphi 0, %s29
      %s30 = sphi 0, %s27
      %s31 = sphi 0, %s30
      %s47 = sphi 0, %s31
      %s51 = sphi 0, %s51
      %s53 = sphi 0, %s51
      %s54 = sphi 0, %s53
      %s68 = sphi 0, %s54
      %s72 = sphi 0, %s72
      %s74 = sphi 0, %s72
      %s75 = sphi 0, %s74
      %s89 = sphi 0, %s75
      %s93 = sphi 0, %s93
      %s95 = sphi 0, %s93
      %s96 = sphi 0, %s95
      %s110 = sphi 0, %s96
      %s116 = sphi 0, %s118
      %s119 = sphi 0, %s116
      %s120 = sphi 0, %s119
      %s136 = sphi 0, %s120
    $region4: #{tpu_custom_call.1} parent=1 // loop_header_branch
      %20 = sbr.rel (%p18) target = $region8
    $region5: #{tpu_custom_call.1} parent=1 // loop_body
      %s22 = ssub.s32 %s17, 1
      %s23 = ssub.s32 %s17, 2
      %s24 = sadd.s32 %s17, 1
      %s25 = ssub.s32 %s17, %s24
      %p26 = scmp.eq.s32.totalorder %s25, 0
      %s28 = sadd.s32 %s27, 1
      %s29 = scalar_select %p26, %s27, %s28
      %p32 = pneg %p26
      %p33 = scmp.eq.s32.totalorder %s17, 1
      %p34 = por %p32, %p33
      %p35 = scmp.ne.s32.totalorder %s27, %s30
      %p36 = scmp.eq.s32.totalorder %s17, 0
      %p37 = por %p35, %p36
      %p38 = scmp.ne.s32.totalorder %s27, %s30
      %p39 = scmp.eq.s32.totalorder %s22, 1
      %p40 = por %p38, %p39
      %p41 = scmp.ne.s32.totalorder %s30, %s31
      %p42 = scmp.eq.s32.totalorder %s22, 0
      %p43 = por %p41, %p42
      %p44 = scmp.ne.s32.totalorder %s30, %s31
      %p45 = scmp.eq.s32.totalorder %s23, 1
      %p46 = por %p44, %p45
      %p48 = scmp.ne.s32.totalorder %s31, %s47
      %p49 = scmp.eq.s32.totalorder %s23, 0
      %p50 = por %p48, %p49
      %s52 = sadd.s32 %s51, 1
      %p55 = scmp.eq.s32.totalorder %s17, 1
      %p56 = scmp.ne.s32.totalorder %s51, %s53
      %p57 = scmp.eq.s32.totalorder %s17, 0
      %p58 = por %p56, %p57
      %p59 = scmp.ne.s32.totalorder %s51, %s53
      %p60 = scmp.eq.s32.totalorder %s22, 1
      %p61 = por %p59, %p60
      %p62 = scmp.ne.s32.totalorder %s53, %s54
      %p63 = scmp.eq.s32.totalorder %s22, 0
      %p64 = por %p62, %p63
      %p65 = scmp.ne.s32.totalorder %s53, %s54
      %p66 = scmp.eq.s32.totalorder %s23, 1
      %p67 = por %p65, %p66
      %p69 = scmp.ne.s32.totalorder %s54, %s68
      %p70 = scmp.eq.s32.totalorder %s23, 0
      %p71 = por %p69, %p70
      %s73 = sadd.s32 %s72, 1
      %p76 = scmp.eq.s32.totalorder %s17, 1
      %p77 = scmp.ne.s32.totalorder %s72, %s74
      %p78 = scmp.eq.s32.totalorder %s17, 0
      %p79 = por %p77, %p78
      %p80 = scmp.ne.s32.totalorder %s72, %s74
      %p81 = scmp.eq.s32.totalorder %s22, 1
      %p82 = por %p80, %p81
      %p83 = scmp.ne.s32.totalorder %s74, %s75
      %p84 = scmp.eq.s32.totalorder %s22, 0
      %p85 = por %p83, %p84
      %p86 = scmp.ne.s32.totalorder %s74, %s75
      %p87 = scmp.eq.s32.totalorder %s23, 1
      %p88 = por %p86, %p87
      %p90 = scmp.ne.s32.totalorder %s75, %s89
      %p91 = scmp.eq.s32.totalorder %s23, 0
      %p92 = por %p90, %p91
      %s94 = sadd.s32 %s93, 1
      %p97 = scmp.eq.s32.totalorder %s17, 1
      %p98 = scmp.ne.s32.totalorder %s93, %s95
      %p99 = scmp.eq.s32.totalorder %s17, 0
      %p100 = por %p98, %p99
      %p101 = scmp.ne.s32.totalorder %s93, %s95
      %p102 = scmp.eq.s32.totalorder %s22, 1
      %p103 = por %p101, %p102
      %p104 = scmp.ne.s32.totalorder %s95, %s96
      %p105 = scmp.eq.s32.totalorder %s22, 0
      %p106 = por %p104, %p105
      %p107 = scmp.ne.s32.totalorder %s95, %s96
      %p108 = scmp.eq.s32.totalorder %s23, 1
      %p109 = por %p107, %p108
      %p111 = scmp.ne.s32.totalorder %s96, %s110
      %p112 = scmp.eq.s32.totalorder %s23, 0
      %p113 = por %p111, %p112
      %s114 = ssub.s32 %s17, %s24
      %p115 = scmp.eq.s32.totalorder %s114, 0
      %s117 = sadd.s32 %s116, 1
      %s118 = scalar_select %p115, %s116, %s117
      %p121 = pneg %p115
      %p122 = scmp.eq.s32.totalorder %s17, 1
      %p123 = por %p121, %p122
      %p124 = scmp.ne.s32.totalorder %s116, %s119
      %p125 = scmp.eq.s32.totalorder %s17, 0
      %p126 = por %p124, %p125
      %p127 = scmp.ne.s32.totalorder %s116, %s119
      %p128 = scmp.eq.s32.totalorder %s22, 1
      %p129 = por %p127, %p128
      %p130 = scmp.ne.s32.totalorder %s119, %s120
      %p131 = scmp.eq.s32.totalorder %s22, 0
      %p132 = por %p130, %p131
      %p133 = scmp.ne.s32.totalorder %s119, %s120
      %p134 = scmp.eq.s32.totalorder %s23, 1
      %p135 = por %p133, %p134
      %p137 = scmp.ne.s32.totalorder %s120, %s136
      %p138 = scmp.eq.s32.totalorder %s23, 0
      %p139 = por %p137, %p138
      %p140 = scmp.le.s32.totalorder 1, %s17
      %p141 = scmp.lt.s32.totalorder %s17, 3
      %p142 = pnand %p140, %p141
      %p143 = pneg %p142
      // Predicated region
      $region9: #{tpu_custom_call.1} parent=5 // pred_check
        _
      $region10: #{tpu_custom_call.1} parent=5 // pred_check_branch
        %145 = sbr.rel (%p142) target = $region12
      $region11: #{tpu_custom_call.1} parent=5 // pred_region
        %s146 = ssub.s32 %s17, 1
        // Predicated region
        $region13: #{tpu_custom_call.1} parent=11 // pred_check
          %p147 = pneg %p64
        $region14: #{tpu_custom_call.1} parent=11 // pred_check_branch
          %149 = sbr.rel (%p147) target = $region16
        $region15: #{tpu_custom_call.1} parent=11 // pred_region
          %s151 = ssub.s32 8192, 8192
          %152 = vsyncadd [#allocation6], %s151
          %s153 = sshll.u32 [#allocation5], 4
          %s154 = int_to_ptr.vmem [resolvable:$true] %s153
          %159 = dma.hbm_to_vmem [thread:$0]  %s1, 8192, %s154, [#allocation6], 128, 128, 8
        $region16: #{tpu_custom_call.1} parent=11 // pred_fallthru
          _
        // Predicated region
        $region17: #{tpu_custom_call.1} parent=11 // pred_check
          %p160 = pneg %p85
        $region18: #{tpu_custom_call.1} parent=11 // pred_check_branch
          %162 = sbr.rel (%p160) target = $region20
        $region19: #{tpu_custom_call.1} parent=11 // pred_region
          _
        $region20: #{tpu_custom_call.1} parent=11 // pred_fallthru
          _
        // Predicated region
        $region21: #{tpu_custom_call.1} parent=11 // pred_check
          %p163 = pneg %p106
        $region22: #{tpu_custom_call.1} parent=11 // pred_check_branch
          %165 = sbr.rel (%p163) target = $region24
        $region23: #{tpu_custom_call.1} parent=11 // pred_region
          _
        $region24: #{tpu_custom_call.1} parent=11 // pred_fallthru
          _
      $region12: #{tpu_custom_call.1} parent=5 // pred_fallthru
        _
      %p166 = scmp.lt.s32.totalorder %s17, 2
      // Predicated region
      $region25: #{tpu_custom_call.1} parent=5 // pred_check
        %p167 = pneg %p166
      $region26: #{tpu_custom_call.1} parent=5 // pred_check_branch
        %169 = sbr.rel (%p167) target = $region28
      $region27: #{tpu_custom_call.1} parent=5 // pred_region
        // Predicated region
        $region29: #{tpu_custom_call.1} parent=27 // pred_check
          %p170 = pneg %p37
        $region30: #{tpu_custom_call.1} parent=27 // pred_check_branch
          %172 = sbr.rel (%p170) target = $region32
        $region31: #{tpu_custom_call.1} parent=27 // pred_region
          %s173 = sand.u32 %s27, 1
          %s174 = scalar_lea.sflag [#allocation3], %s173
          %s175 = sand.u32 %s27, 1
          %s176 = smul.addr %s175, 128
          %s177 = scalar_lea.vmem [#allocation2], %s176
          %s178 = smul.u32 8, %s17
          %s180 = ssub.s32 2048, 2048
          %181 = vsyncadd %s174, %s180
          %s182 = smul.addr %s178, 4
          %s183 = smul.addr %s182, 64
          %s184 = scalar_lea.hbm %s0, %s183
          %s185 = sshll.u32 %s177, 4
          %s186 = int_to_ptr.vmem [resolvable:$true] %s185
          %191 = dma.hbm_to_vmem [thread:$0]  %s184, 2048, %s186, %s174, 256, 256, 16
        $region32: #{tpu_custom_call.1} parent=27 // pred_fallthru
          _
      $region28: #{tpu_custom_call.1} parent=5 // pred_fallthru
        _
      %p192 = scmp.le.s32.totalorder 1, %s17
      %p193 = scmp.lt.s32.totalorder %s17, 3
      %p194 = pnand %p192, %p193
      %p195 = pneg %p194
      // Predicated region
      $region33: #{tpu_custom_call.1} parent=5 // pred_check
        _
      $region34: #{tpu_custom_call.1} parent=5 // pred_check_branch
        %197 = sbr.rel (%p194) target = $region36
      $region35: #{tpu_custom_call.1} parent=5 // pred_region
        %s198 = ssub.s32 %s17, 1
        %s199 = sand.u32 %s30, 1
        %s200 = scalar_lea.sflag [#allocation3], %s199
        %s201 = sand.u32 %s30, 1
        %s202 = smul.addr %s201, 128
        %s203 = scalar_lea.vmem [#allocation2], %s202
        // Predicated region
        $region37: #{tpu_custom_call.1} parent=35 // pred_check
          %p204 = pneg %p43
        $region38: #{tpu_custom_call.1} parent=35 // pred_check_branch
          %206 = sbr.rel (%p204) target = $region40
        $region39: #{tpu_custom_call.1} parent=35 // pred_region
          %207 = dma.done %s200, 2048
        $region40: #{tpu_custom_call.1} parent=35 // pred_fallthru
          _
        // Predicated region
        $region41: #{tpu_custom_call.1} parent=35 // pred_check
          %p208 = pneg %p64
        $region42: #{tpu_custom_call.1} parent=35 // pred_check_branch
          %210 = sbr.rel (%p208) target = $region44
        $region43: #{tpu_custom_call.1} parent=35 // pred_region
          %211 = dma.done [#allocation6], 8192
        $region44: #{tpu_custom_call.1} parent=35 // pred_fallthru
          _
        %s212 = sand.u32 %s30, 1
        %s213 = scalar_lea.sflag [#allocation3], %s212
        %s214 = sand.u32 %s30, 1
        %s215 = smul.addr %s214, 128
        %s216 = scalar_lea.vmem [#allocation2], %s215
        %p217 = pneg %p43
        %p218 = pneg %p40
        %p219 = pneg %p64
        %p220 = pneg %p61
        %p221 = pneg %p85
        %p222 = pneg %p82
        %p223 = pneg %p106
        %p224 = pneg %p103
        %p225 = pneg %p132
        %p226 = pneg %p129
        %s227 = sand.u32 %s119, 1
        %s228 = scalar_lea.sflag [#allocation4], %s227
        %s229 = sand.u32 %s119, 1
        %s230 = smul.addr %s229, 64
        %s231 = scalar_lea.vmem [#allocation7], %s230
        %s232 = smul.u32 8, %s22
        %s233 = smul.u32 8, %s22
        %v234 = vld [vmem:[%s203] sm:$0xff]
        %v235 = vld [vmem:[%s203 + $0x8] sm:$0xff]
        %v236 = vld [vmem:[%s203 + $0x10] sm:$0xff]
        %v237 = vld [vmem:[%s203 + $0x18] sm:$0xff]
        %v238 = vld [vmem:[%s203 + $0x20] sm:$0xff]
        %v239 = vld [vmem:[%s203 + $0x28] sm:$0xff]
        %v240 = vld [vmem:[%s203 + $0x30] sm:$0xff]
        %v241 = vld [vmem:[%s203 + $0x38] sm:$0xff]
        %v242 = vld [vmem:[%s203 + $0x40] sm:$0xff]
        %v243 = vld [vmem:[%s203 + $0x48] sm:$0xff]
        %v244 = vld [vmem:[%s203 + $0x50] sm:$0xff]
        %v245 = vld [vmem:[%s203 + $0x58] sm:$0xff]
        %v246 = vld [vmem:[%s203 + $0x60] sm:$0xff]
        %v247 = vld [vmem:[%s203 + $0x68] sm:$0xff]
        %v248 = vld [vmem:[%s203 + $0x70] sm:$0xff]
        %v249 = vld [vmem:[%s203 + $0x78] sm:$0xff]
        %v250 = vld [vmem:[#allocation5] sm:$0xff]
        %v251 = vld [vmem:[#allocation5 + $0x8] sm:$0xff]
        %v252 = vld [vmem:[#allocation5 + $0x10] sm:$0xff]
        %v253 = vld [vmem:[#allocation5 + $0x18] sm:$0xff]
        %v254 = vld [vmem:[#allocation5 + $0x20] sm:$0xff]
        %v255 = vld [vmem:[#allocation5 + $0x28] sm:$0xff]
        %v256 = vld [vmem:[#allocation5 + $0x30] sm:$0xff]
        %v257 = vld [vmem:[#allocation5 + $0x38] sm:$0xff]
        %v258 = vld [vmem:[#allocation5 + $0x40] sm:$0xff]
        %v259 = vld [vmem:[#allocation5 + $0x48] sm:$0xff]
        %v260 = vld [vmem:[#allocation5 + $0x50] sm:$0xff]
        %v261 = vld [vmem:[#allocation5 + $0x58] sm:$0xff]
        %v262 = vld [vmem:[#allocation5 + $0x60] sm:$0xff]
        %v263 = vld [vmem:[#allocation5 + $0x68] sm:$0xff]
        %v264 = vld [vmem:[#allocation5 + $0x70] sm:$0xff]
        %v265 = vld [vmem:[#allocation5 + $0x78] sm:$0xff]
        %v266 = vld [vmem:[#allocation5 + $0x80] sm:$0xff]
        %v267 = vld [vmem:[#allocation5 + $0x88] sm:$0xff]
        %v268 = vld [vmem:[#allocation5 + $0x90] sm:$0xff]
        %v269 = vld [vmem:[#allocation5 + $0x98] sm:$0xff]
        %v270 = vld [vmem:[#allocation5 + $0xa0] sm:$0xff]
        %v271 = vld [vmem:[#allocation5 + $0xa8] sm:$0xff]
        %v272 = vld [vmem:[#allocation5 + $0xb0] sm:$0xff]
        %v273 = vld [vmem:[#allocation5 + $0xb8] sm:$0xff]
        %v274 = vld [vmem:[#allocation5 + $0xc0] sm:$0xff]
        %v275 = vld [vmem:[#allocation5 + $0xc8] sm:$0xff]
        %v276 = vld [vmem:[#allocation5 + $0xd0] sm:$0xff]
        %v277 = vld [vmem:[#allocation5 + $0xd8] sm:$0xff]
        %v278 = vld [vmem:[#allocation5 + $0xe0] sm:$0xff]
        %v279 = vld [vmem:[#allocation5 + $0xe8] sm:$0xff]
        %v280 = vld [vmem:[#allocation5 + $0xf0] sm:$0xff]
        %v281 = vld [vmem:[#allocation5 + $0xf8] sm:$0xff]
        %v282 = vld [vmem:[#allocation5 + $0x100] sm:$0xff]
        %v283 = vld [vmem:[#allocation5 + $0x108] sm:$0xff]
        %v284 = vld [vmem:[#allocation5 + $0x110] sm:$0xff]
        %v285 = vld [vmem:[#allocation5 + $0x118] sm:$0xff]
        %v286 = vld [vmem:[#allocation5 + $0x120] sm:$0xff]
        %v287 = vld [vmem:[#allocation5 + $0x128] sm:$0xff]
        %v288 = vld [vmem:[#allocation5 + $0x130] sm:$0xff]
        %v289 = vld [vmem:[#allocation5 + $0x138] sm:$0xff]
        %v290 = vld [vmem:[#allocation5 + $0x140] sm:$0xff]
        %v291 = vld [vmem:[#allocation5 + $0x148] sm:$0xff]
        %v292 = vld [vmem:[#allocation5 + $0x150] sm:$0xff]
        %v293 = vld [vmem:[#allocation5 + $0x158] sm:$0xff]
        %v294 = vld [vmem:[#allocation5 + $0x160] sm:$0xff]
        %v295 = vld [vmem:[#allocation5 + $0x168] sm:$0xff]
        %v296 = vld [vmem:[#allocation5 + $0x170] sm:$0xff]
        %v297 = vld [vmem:[#allocation5 + $0x178] sm:$0xff]
        %v298 = vld [vmem:[#allocation5 + $0x180] sm:$0xff]
        %v299 = vld [vmem:[#allocation5 + $0x188] sm:$0xff]
        %v300 = vld [vmem:[#allocation5 + $0x190] sm:$0xff]
        %v301 = vld [vmem:[#allocation5 + $0x198] sm:$0xff]
        %v302 = vld [vmem:[#allocation5 + $0x1a0] sm:$0xff]
        %v303 = vld [vmem:[#allocation5 + $0x1a8] sm:$0xff]
        %v304 = vld [vmem:[#allocation5 + $0x1b0] sm:$0xff]
        %v305 = vld [vmem:[#allocation5 + $0x1b8] sm:$0xff]
        %v306 = vld [vmem:[#allocation5 + $0x1c0] sm:$0xff]
        %v307 = vld [vmem:[#allocation5 + $0x1c8] sm:$0xff]
        %v308 = vld [vmem:[#allocation5 + $0x1d0] sm:$0xff]
        %v309 = vld [vmem:[#allocation5 + $0x1d8] sm:$0xff]
        %v310 = vld [vmem:[#allocation5 + $0x1e0] sm:$0xff]
        %v311 = vld [vmem:[#allocation5 + $0x1e8] sm:$0xff]
        %v312 = vld [vmem:[#allocation5 + $0x1f0] sm:$0xff]
        %v313 = vld [vmem:[#allocation5 + $0x1f8] sm:$0xff]
        %v314 = vld [vmem:[%s2] sm:$0x3]
        %v316 = vlaneseq
        %v317 = vshrl.u32 %v316, 7
        %v318 = vsub.s32 0, %v317
        %v319 = vrot.slane %v314, %v318
        %v320 = vlaneseq
        %v321 = vshrl.u32 %v320, 7
        %v322 = vsub.s32 1, %v321
        %v323 = vrot.slane %v314, %v322
        %v342 = vunpack.c.l.b16 %v234
        %v343 = vunpack.c.h.b16 %v234
        %v344 = vunpack.c.l.b16 %v235
        %v345 = vunpack.c.h.b16 %v235
        %v346 = vunpack.c.l.b16 %v236
        %v347 = vunpack.c.h.b16 %v236
        %v348 = vunpack.c.l.b16 %v237
        %v349 = vunpack.c.h.b16 %v237
        %v350 = vunpack.c.l.b16 %v238
        %v351 = vunpack.c.h.b16 %v238
        %v352 = vunpack.c.l.b16 %v239
        %v353 = vunpack.c.h.b16 %v239
        %v354 = vunpack.c.l.b16 %v240
        %v355 = vunpack.c.h.b16 %v240
        %v356 = vunpack.c.l.b16 %v241
        %v357 = vunpack.c.h.b16 %v241
        %v358 = vunpack.c.l.b16 %v242
        %v359 = vunpack.c.h.b16 %v242
        %v360 = vunpack.c.l.b16 %v243
        %v361 = vunpack.c.h.b16 %v243
        %v362 = vunpack.c.l.b16 %v244
        %v363 = vunpack.c.h.b16 %v244
        %v364 = vunpack.c.l.b16 %v245
        %v365 = vunpack.c.h.b16 %v245
        %v366 = vunpack.c.l.b16 %v246
        %v367 = vunpack.c.h.b16 %v246
        %v368 = vunpack.c.l.b16 %v247
        %v369 = vunpack.c.h.b16 %v247
        %v370 = vunpack.c.l.b16 %v248
        %v371 = vunpack.c.h.b16 %v248
        %v372 = vunpack.c.l.b16 %v249
        %v373 = vunpack.c.h.b16 %v249
        %v374 = vpack.c.b16 %v346, %v342
        %v375 = vpack.c.b16 %v347, %v343
        %v376 = vpack.c.b16 %v348, %v344
        %v377 = vpack.c.b16 %v349, %v345
        %v378 = vpack.c.b16 %v354, %v350
        %v379 = vpack.c.b16 %v355, %v351
        %v380 = vpack.c.b16 %v356, %v352
        %v381 = vpack.c.b16 %v357, %v353
        %v382 = vpack.c.b16 %v362, %v358
        %v383 = vpack.c.b16 %v363, %v359
        %v384 = vpack.c.b16 %v364, %v360
        %v385 = vpack.c.b16 %v365, %v361
        %v386 = vpack.c.b16 %v370, %v366
        %v387 = vpack.c.b16 %v371, %v367
        %v388 = vpack.c.b16 %v372, %v368
        %v389 = vpack.c.b16 %v373, %v369
        %v470 = vunpack.c.l.b16 %v250
        %v471 = vunpack.c.h.b16 %v250
        %v472 = vunpack.c.l.b16 %v251
        %v473 = vunpack.c.h.b16 %v251
        %v474 = vunpack.c.l.b16 %v252
        %v475 = vunpack.c.h.b16 %v252
        %v476 = vunpack.c.l.b16 %v253
        %v477 = vunpack.c.h.b16 %v253
        %v478 = vunpack.c.l.b16 %v254
        %v479 = vunpack.c.h.b16 %v254
        %v480 = vunpack.c.l.b16 %v255
        %v481 = vunpack.c.h.b16 %v255
        %v482 = vunpack.c.l.b16 %v256
        %v483 = vunpack.c.h.b16 %v256
        %v484 = vunpack.c.l.b16 %v257
        %v485 = vunpack.c.h.b16 %v257
        %v486 = vunpack.c.l.b16 %v258
        %v487 = vunpack.c.h.b16 %v258
        %v488 = vunpack.c.l.b16 %v259
        %v489 = vunpack.c.h.b16 %v259
        %v490 = vunpack.c.l.b16 %v260
        %v491 = vunpack.c.h.b16 %v260
        %v492 = vunpack.c.l.b16 %v261
        %v493 = vunpack.c.h.b16 %v261
        %v494 = vunpack.c.l.b16 %v262
        %v495 = vunpack.c.h.b16 %v262
        %v496 = vunpack.c.l.b16 %v263
        %v497 = vunpack.c.h.b16 %v263
        %v498 = vunpack.c.l.b16 %v264
        %v499 = vunpack.c.h.b16 %v264
        %v500 = vunpack.c.l.b16 %v265
        %v501 = vunpack.c.h.b16 %v265
        %v502 = vunpack.c.l.b16 %v266
        %v503 = vunpack.c.h.b16 %v266
        %v504 = vunpack.c.l.b16 %v267
        %v505 = vunpack.c.h.b16 %v267
        %v506 = vunpack.c.l.b16 %v268
        %v507 = vunpack.c.h.b16 %v268
        %v508 = vunpack.c.l.b16 %v269
        %v509 = vunpack.c.h.b16 %v269
        %v510 = vunpack.c.l.b16 %v270
        %v511 = vunpack.c.h.b16 %v270
        %v512 = vunpack.c.l.b16 %v271
        %v513 = vunpack.c.h.b16 %v271
        %v514 = vunpack.c.l.b16 %v272
        %v515 = vunpack.c.h.b16 %v272
        %v516 = vunpack.c.l.b16 %v273
        %v517 = vunpack.c.h.b16 %v273
        %v518 = vunpack.c.l.b16 %v274
        %v519 = vunpack.c.h.b16 %v274
        %v520 = vunpack.c.l.b16 %v275
        %v521 = vunpack.c.h.b16 %v275
        %v522 = vunpack.c.l.b16 %v276
        %v523 = vunpack.c.h.b16 %v276
        %v524 = vunpack.c.l.b16 %v277
        %v525 = vunpack.c.h.b16 %v277
        %v526 = vunpack.c.l.b16 %v278
        %v527 = vunpack.c.h.b16 %v278
        %v528 = vunpack.c.l.b16 %v279
        %v529 = vunpack.c.h.b16 %v279
        %v530 = vunpack.c.l.b16 %v280
        %v531 = vunpack.c.h.b16 %v280
        %v532 = vunpack.c.l.b16 %v281
        %v533 = vunpack.c.h.b16 %v281
        %v534 = vunpack.c.l.b16 %v282
        %v535 = vunpack.c.h.b16 %v282
        %v536 = vunpack.c.l.b16 %v283
        %v537 = vunpack.c.h.b16 %v283
        %v538 = vunpack.c.l.b16 %v284
        %v539 = vunpack.c.h.b16 %v284
        %v540 = vunpack.c.l.b16 %v285
        %v541 = vunpack.c.h.b16 %v285
        %v542 = vunpack.c.l.b16 %v286
        %v543 = vunpack.c.h.b16 %v286
        %v544 = vunpack.c.l.b16 %v287
        %v545 = vunpack.c.h.b16 %v287
        %v546 = vunpack.c.l.b16 %v288
        %v547 = vunpack.c.h.b16 %v288
        %v548 = vunpack.c.l.b16 %v289
        %v549 = vunpack.c.h.b16 %v289
        %v550 = vunpack.c.l.b16 %v290
        %v551 = vunpack.c.h.b16 %v290
        %v552 = vunpack.c.l.b16 %v291
        %v553 = vunpack.c.h.b16 %v291
        %v554 = vunpack.c.l.b16 %v292
        %v555 = vunpack.c.h.b16 %v292
        %v556 = vunpack.c.l.b16 %v293
        %v557 = vunpack.c.h.b16 %v293
        %v558 = vunpack.c.l.b16 %v294
        %v559 = vunpack.c.h.b16 %v294
        %v560 = vunpack.c.l.b16 %v295
        %v561 = vunpack.c.h.b16 %v295
        %v562 = vunpack.c.l.b16 %v296
        %v563 = vunpack.c.h.b16 %v296
        %v564 = vunpack.c.l.b16 %v297
        %v565 = vunpack.c.h.b16 %v297
        %v566 = vunpack.c.l.b16 %v298
        %v567 = vunpack.c.h.b16 %v298
        %v568 = vunpack.c.l.b16 %v299
        %v569 = vunpack.c.h.b16 %v299
        %v570 = vunpack.c.l.b16 %v300
        %v571 = vunpack.c.h.b16 %v300
        %v572 = vunpack.c.l.b16 %v301
        %v573 = vunpack.c.h.b16 %v301
        %v574 = vunpack.c.l.b16 %v302
        %v575 = vunpack.c.h.b16 %v302
        %v576 = vunpack.c.l.b16 %v303
        %v577 = vunpack.c.h.b16 %v303
        %v578 = vunpack.c.l.b16 %v304
        %v579 = vunpack.c.h.b16 %v304
        %v580 = vunpack.c.l.b16 %v305
        %v581 = vunpack.c.h.b16 %v305
        %v582 = vunpack.c.l.b16 %v306
        %v583 = vunpack.c.h.b16 %v306
        %v584 = vunpack.c.l.b16 %v307
        %v585 = vunpack.c.h.b16 %v307
        %v586 = vunpack.c.l.b16 %v308
        %v587 = vunpack.c.h.b16 %v308
        %v588 = vunpack.c.l.b16 %v309
        %v589 = vunpack.c.h.b16 %v309
        %v590 = vunpack.c.l.b16 %v310
        %v591 = vunpack.c.h.b16 %v310
        %v592 = vunpack.c.l.b16 %v311
        %v593 = vunpack.c.h.b16 %v311
        %v594 = vunpack.c.l.b16 %v312
        %v595 = vunpack.c.h.b16 %v312
        %v596 = vunpack.c.l.b16 %v313
        %v597 = vunpack.c.h.b16 %v313
        %v598 = vpack.c.b16 %v472, %v470
        %v599 = vpack.c.b16 %v473, %v471
        %v600 = vpack.c.b16 %v476, %v474
        %v601 = vpack.c.b16 %v477, %v475
        %v602 = vpack.c.b16 %v480, %v478
        %v603 = vpack.c.b16 %v481, %v479
        %v604 = vpack.c.b16 %v484, %v482
        %v605 = vpack.c.b16 %v485, %v483
        %v606 = vpack.c.b16 %v488, %v486
        %v607 = vpack.c.b16 %v489, %v487
        %v608 = vpack.c.b16 %v492, %v490
        %v609 = vpack.c.b16 %v493, %v491
        %v610 = vpack.c.b16 %v496, %v494
        %v611 = vpack.c.b16 %v497, %v495
        %v612 = vpack.c.b16 %v500, %v498
        %v613 = vpack.c.b16 %v501, %v499
        %v614 = vpack.c.b16 %v504, %v502
        %v615 = vpack.c.b16 %v505, %v503
        %v616 = vpack.c.b16 %v508, %v506
        %v617 = vpack.c.b16 %v509, %v507
        %v618 = vpack.c.b16 %v512, %v510
        %v619 = vpack.c.b16 %v513, %v511
        %v620 = vpack.c.b16 %v516, %v514
        %v621 = vpack.c.b16 %v517, %v515
        %v622 = vpack.c.b16 %v520, %v518
        %v623 = vpack.c.b16 %v521, %v519
        %v624 = vpack.c.b16 %v524, %v522
        %v625 = vpack.c.b16 %v525, %v523
        %v626 = vpack.c.b16 %v528, %v526
        %v627 = vpack.c.b16 %v529, %v527
        %v628 = vpack.c.b16 %v532, %v530
        %v629 = vpack.c.b16 %v533, %v531
        %v630 = vpack.c.b16 %v536, %v534
        %v631 = vpack.c.b16 %v537, %v535
        %v632 = vpack.c.b16 %v540, %v538
        %v633 = vpack.c.b16 %v541, %v539
        %v634 = vpack.c.b16 %v544, %v542
        %v635 = vpack.c.b16 %v545, %v543
        %v636 = vpack.c.b16 %v548, %v546
        %v637 = vpack.c.b16 %v549, %v547
        %v638 = vpack.c.b16 %v552, %v550
        %v639 = vpack.c.b16 %v553, %v551
        %v640 = vpack.c.b16 %v556, %v554
        %v641 = vpack.c.b16 %v557, %v555
        %v642 = vpack.c.b16 %v560, %v558
        %v643 = vpack.c.b16 %v561, %v559
        %v644 = vpack.c.b16 %v564, %v562
        %v645 = vpack.c.b16 %v565, %v563
        %v646 = vpack.c.b16 %v568, %v566
        %v647 = vpack.c.b16 %v569, %v567
        %v648 = vpack.c.b16 %v572, %v570
        %v649 = vpack.c.b16 %v573, %v571
        %v650 = vpack.c.b16 %v576, %v574
        %v651 = vpack.c.b16 %v577, %v575
        %v652 = vpack.c.b16 %v580, %v578
        %v653 = vpack.c.b16 %v581, %v579
        %v654 = vpack.c.b16 %v584, %v582
        %v655 = vpack.c.b16 %v585, %v583
        %v656 = vpack.c.b16 %v588, %v586
        %v657 = vpack.c.b16 %v589, %v587
        %v658 = vpack.c.b16 %v592, %v590
        %v659 = vpack.c.b16 %v593, %v591
        %v660 = vpack.c.b16 %v596, %v594
        %v661 = vpack.c.b16 %v597, %v595
        %726 = vmatprep.subr.bf16.mxu0 %v599
        %727 = vmatpush1.bf16.msra.mxu0 %v598
        %728 = vmatprep.subr.bf16.mxu0 %v601
        %729 = vmatpush1.bf16.msra.mxu0 %v600
        %730 = vmatprep.subr.bf16.mxu0 %v603
        %731 = vmatpush1.bf16.msra.mxu0 %v602
        %732 = vmatprep.subr.bf16.mxu0 %v605
        %733 = vmatpush1.bf16.msra.mxu0 %v604
        %734 = vmatprep.subr.bf16.mxu0 %v607
        %735 = vmatpush1.bf16.msra.mxu0 %v606
        %736 = vmatprep.subr.bf16.mxu0 %v609
        %737 = vmatpush1.bf16.msra.mxu0 %v608
        %738 = vmatprep.subr.bf16.mxu0 %v611
        %739 = vmatpush1.bf16.msra.mxu0 %v610
        %740 = vmatprep.subr.bf16.mxu0 %v613
        %741 = vmatpush1.bf16.msra.mxu0 %v612
        %742 = vmatprep.subr.bf16.mxu0 %v615
        %743 = vmatpush1.bf16.msra.mxu0 %v614
        %744 = vmatprep.subr.bf16.mxu0 %v617
        %745 = vmatpush1.bf16.msra.mxu0 %v616
        %746 = vmatprep.subr.bf16.mxu0 %v619
        %747 = vmatpush1.bf16.msra.mxu0 %v618
        %748 = vmatprep.subr.bf16.mxu0 %v621
        %749 = vmatpush1.bf16.msra.mxu0 %v620
        %750 = vmatprep.subr.bf16.mxu0 %v623
        %751 = vmatpush1.bf16.msra.mxu0 %v622
        %752 = vmatprep.subr.bf16.mxu0 %v625
        %753 = vmatpush1.bf16.msra.mxu0 %v624
        %754 = vmatprep.subr.bf16.mxu0 %v627
        %755 = vmatpush1.bf16.msra.mxu0 %v626
        %756 = vmatprep.subr.bf16.mxu0 %v629
        %757 = vmatpush1.bf16.msra.mxu0 %v628
        %758 = vmatprep.mubr.bf16.mxu0 %v375
        %759 = vmatmul.mubr.bf16.gmra.mrb[0].mxu0 %v374
        %v760 = vpop.f32.mrb[0].mxu0
        %v761 = vadd.f32 %v319, %v760
        %v762 = vpop.f32.mrb[0].mxu0
        %v763 = vadd.f32 %v323, %v762
        %v764 = vpop.f32.mrb[0].mxu0
        %v765 = vadd.f32 %v319, %v764
        %v766 = vpop.f32.mrb[0].mxu0
        %v767 = vadd.f32 %v323, %v766
        %768 = vmatprep.mubr.bf16.mxu0 %v379
        %769 = vmatmul.mubr.bf16.gmra.mrb[0].mxu0 %v378
        %v770 = vpop.f32.mrb[0].mxu0
        %v771 = vadd.f32 %v319, %v770
        %v772 = vpop.f32.mrb[0].mxu0
        %v773 = vadd.f32 %v323, %v772
        %v774 = vpop.f32.mrb[0].mxu0
        %v775 = vadd.f32 %v319, %v774
        %v776 = vpop.f32.mrb[0].mxu0
        %v777 = vadd.f32 %v323, %v776
        %778 = vmatprep.mubr.bf16.mxu0 %v383
        %779 = vmatmul.mubr.bf16.gmra.mrb[0].mxu0 %v382
        %v780 = vpop.f32.mrb[0].mxu0
        %v781 = vadd.f32 %v319, %v780
        %v782 = vpop.f32.mrb[0].mxu0
        %v783 = vadd.f32 %v323, %v782
        %v784 = vpop.f32.mrb[0].mxu0
        %v785 = vadd.f32 %v319, %v784
        %v786 = vpop.f32.mrb[0].mxu0
        %v787 = vadd.f32 %v323, %v786
        %788 = vmatprep.mubr.bf16.mxu0 %v387
        %789 = vmatmul.mubr.bf16.gmra.mrb[0].mxu0 %v386
        %v790 = vpop.f32.mrb[0].mxu0
        %v791 = vadd.f32 %v319, %v790
        %v792 = vpop.f32.mrb[0].mxu0
        %v793 = vadd.f32 %v323, %v792
        %v794 = vpop.f32.mrb[0].mxu0
        %v795 = vadd.f32 %v319, %v794
        %v796 = vpop.f32.mrb[0].mxu0
        %v797 = vadd.f32 %v323, %v796
        %798 = vdwg.mxu0
        %799 = vmatprep.subr.bf16.mxu0 %v631
        %800 = vmatpush1.bf16.msra.mxu0 %v630
        %801 = vmatprep.subr.bf16.mxu0 %v633
        %802 = vmatpush1.bf16.msra.mxu0 %v632
        %803 = vmatprep.subr.bf16.mxu0 %v635
        %804 = vmatpush1.bf16.msra.mxu0 %v634
        %805 = vmatprep.subr.bf16.mxu0 %v637
        %806 = vmatpush1.bf16.msra.mxu0 %v636
        %807 = vmatprep.subr.bf16.mxu0 %v639
        %808 = vmatpush1.bf16.msra.mxu0 %v638
        %809 = vmatprep.subr.bf16.mxu0 %v641
        %810 = vmatpush1.bf16.msra.mxu0 %v640
        %811 = vmatprep.subr.bf16.mxu0 %v643
        %812 = vmatpush1.bf16.msra.mxu0 %v642
        %813 = vmatprep.subr.bf16.mxu0 %v645
        %814 = vmatpush1.bf16.msra.mxu0 %v644
        %815 = vmatprep.subr.bf16.mxu0 %v647
        %816 = vmatpush1.bf16.msra.mxu0 %v646
        %817 = vmatprep.subr.bf16.mxu0 %v649
        %818 = vmatpush1.bf16.msra.mxu0 %v648
        %819 = vmatprep.subr.bf16.mxu0 %v651
        %820 = vmatpush1.bf16.msra.mxu0 %v650
        %821 = vmatprep.subr.bf16.mxu0 %v653
        %822 = vmatpush1.bf16.msra.mxu0 %v652
        %823 = vmatprep.subr.bf16.mxu0 %v655
        %824 = vmatpush1.bf16.msra.mxu0 %v654
        %825 = vmatprep.subr.bf16.mxu0 %v657
        %826 = vmatpush1.bf16.msra.mxu0 %v656
        %827 = vmatprep.subr.bf16.mxu0 %v659
        %828 = vmatpush1.bf16.msra.mxu0 %v658
        %829 = vmatprep.subr.bf16.mxu0 %v661
        %830 = vmatpush1.bf16.msra.mxu0 %v660
        %831 = vmatprep.mubr.bf16.mxu0 %v377
        %832 = vmatmul.mubr.bf16.gmra.mrb[0].mxu0 %v376
        %v833 = vpop.f32.mrb[0].mxu0
        %v834 = vadd.f32 %v761, %v833
        %v835 = vpop.f32.mrb[0].mxu0
        %v836 = vadd.f32 %v763, %v835
        %v837 = vpop.f32.mrb[0].mxu0
        %v838 = vadd.f32 %v765, %v837
        %v839 = vpop.f32.mrb[0].mxu0
        %v840 = vadd.f32 %v767, %v839
        %841 = vmatprep.mubr.bf16.mxu0 %v381
        %842 = vmatmul.mubr.bf16.gmra.mrb[0].mxu0 %v380
        %v843 = vpop.f32.mrb[0].mxu0
        %v844 = vadd.f32 %v771, %v843
        %v845 = vpop.f32.mrb[0].mxu0
        %v846 = vadd.f32 %v773, %v845
        %v847 = vpop.f32.mrb[0].mxu0
        %v848 = vadd.f32 %v775, %v847
        %v849 = vpop.f32.mrb[0].mxu0
        %v850 = vadd.f32 %v777, %v849
        %851 = vmatprep.mubr.bf16.mxu0 %v385
        %852 = vmatmul.mubr.bf16.gmra.mrb[0].mxu0 %v384
        %v853 = vpop.f32.mrb[0].mxu0
        %v854 = vadd.f32 %v781, %v853
        %v855 = vpop.f32.mrb[0].mxu0
        %v856 = vadd.f32 %v783, %v855
        %v857 = vpop.f32.mrb[0].mxu0
        %v858 = vadd.f32 %v785, %v857
        %v859 = vpop.f32.mrb[0].mxu0
        %v860 = vadd.f32 %v787, %v859
        %861 = vmatprep.mubr.bf16.mxu0 %v389
        %862 = vmatmul.mubr.bf16.gmra.mrb[0].mxu0 %v388
        %v863 = vpop.f32.mrb[0].mxu0
        %v864 = vadd.f32 %v791, %v863
        %v865 = vpop.f32.mrb[0].mxu0
        %v866 = vadd.f32 %v793, %v865
        %v867 = vpop.f32.mrb[0].mxu0
        %v868 = vadd.f32 %v795, %v867
        %v869 = vpop.f32.mrb[0].mxu0
        %v870 = vadd.f32 %v797, %v869
        %871 = vdwg.mxu0
        %v872 = vmax.f32 %v834, 0.0
        %v873 = vmax.f32 %v836, 0.0
        %v874 = vmax.f32 %v838, 0.0
        %v875 = vmax.f32 %v840, 0.0
        %v876 = vmax.f32 %v844, 0.0
        %v877 = vmax.f32 %v846, 0.0
        %v878 = vmax.f32 %v848, 0.0
        %v879 = vmax.f32 %v850, 0.0
        %v880 = vmax.f32 %v854, 0.0
        %v881 = vmax.f32 %v856, 0.0
        %v882 = vmax.f32 %v858, 0.0
        %v883 = vmax.f32 %v860, 0.0
        %v884 = vmax.f32 %v864, 0.0
        %v885 = vmax.f32 %v866, 0.0
        %v886 = vmax.f32 %v868, 0.0
        %v887 = vmax.f32 %v870, 0.0
        %s888 = smul.u32 %s22, 64
        %v889 = vlaneseq
        %v890 = vshrl.u32 %v889, 7
        %v891 = vadd.s32 %v890, 8
        %v892 = vadd.s32 %v890, 16
        %v893 = vadd.s32 %v890, 24
        %v894 = vadd.s32 %v890, 32
        %v895 = vadd.s32 %v890, 40
        %v896 = vadd.s32 %v890, 48
        %v897 = vadd.s32 %v890, 56
        %v898 = vstv %s888
        %v899 = vadd.s32 %v898, %v890
        %v900 = vadd.s32 %v898, %v891
        %v901 = vadd.s32 %v898, %v892
        %v902 = vadd.s32 %v898, %v893
        %v903 = vadd.s32 %v898, %v894
        %v904 = vadd.s32 %v898, %v895
        %v905 = vadd.s32 %v898, %v896
        %v906 = vadd.s32 %v898, %v897
        %v907 = vld [vmem:[%s3] sm:$0x3]
        %v908 = vlaneseq
        %v909 = vshrl.u32 %v908, 7
        %v910 = vsub.s32 0, %v909
        %v911 = vrot.slane %v907, %v910
        %v912 = vlaneseq
        %v913 = vshrl.u32 %v912, 7
        %v914 = vsub.s32 1, %v913
        %v915 = vrot.slane %v907, %v914
        %vm916 = vcmp.lt.s32.totalorder %v899, %v911
        %vm917 = vcmp.lt.s32.totalorder %v899, %v915
        %vm918 = vcmp.lt.s32.totalorder %v900, %v911
        %vm919 = vcmp.lt.s32.totalorder %v900, %v915
        %vm920 = vcmp.lt.s32.totalorder %v901, %v911
        %vm921 = vcmp.lt.s32.totalorder %v901, %v915
        %vm922 = vcmp.lt.s32.totalorder %v902, %v911
        %vm923 = vcmp.lt.s32.totalorder %v902, %v915
        %vm924 = vcmp.lt.s32.totalorder %v903, %v911
        %vm925 = vcmp.lt.s32.totalorder %v903, %v915
        %vm926 = vcmp.lt.s32.totalorder %v904, %v911
        %vm927 = vcmp.lt.s32.totalorder %v904, %v915
        %vm928 = vcmp.lt.s32.totalorder %v905, %v911
        %vm929 = vcmp.lt.s32.totalorder %v905, %v915
        %vm930 = vcmp.lt.s32.totalorder %v906, %v911
        %vm931 = vcmp.lt.s32.totalorder %v906, %v915
        %v932 = vsel %vm916, %v872, 0.0
        %v933 = vsel %vm917, %v873, 0.0
        %v934 = vsel %vm918, %v874, 0.0
        %v935 = vsel %vm919, %v875, 0.0
        %v936 = vsel %vm920, %v876, 0.0
        %v937 = vsel %vm921, %v877, 0.0
        %v938 = vsel %vm922, %v878, 0.0
        %v939 = vsel %vm923, %v879, 0.0
        %v940 = vsel %vm924, %v880, 0.0
        %v941 = vsel %vm925, %v881, 0.0
        %v942 = vsel %vm926, %v882, 0.0
        %v943 = vsel %vm927, %v883, 0.0
        %v944 = vsel %vm928, %v884, 0.0
        %v945 = vsel %vm929, %v885, 0.0
        %v946 = vsel %vm930, %v886, 0.0
        %v947 = vsel %vm931, %v887, 0.0
        %v948 = vmax.f32 %v932, %v933
        %v949 = vmax.f32 %v934, %v935
        %v950 = vmax.f32 %v936, %v937
        %v951 = vmax.f32 %v938, %v939
        %v952 = vmax.f32 %v940, %v941
        %v953 = vmax.f32 %v942, %v943
        %v954 = vmax.f32 %v944, %v945
        %v955 = vmax.f32 %v946, %v947
        %956 = vst [vmem:[%s231] sm:$0xff] %v948
        %957 = vst [vmem:[%s231 + $0x8] sm:$0xff] %v949
        %958 = vst [vmem:[%s231 + $0x10] sm:$0xff] %v950
        %959 = vst [vmem:[%s231 + $0x18] sm:$0xff] %v951
        %960 = vst [vmem:[%s231 + $0x20] sm:$0xff] %v952
        %961 = vst [vmem:[%s231 + $0x28] sm:$0xff] %v953
        %962 = vst [vmem:[%s231 + $0x30] sm:$0xff] %v954
        %963 = vst [vmem:[%s231 + $0x38] sm:$0xff] %v955
        %s964 = sand.u32 %s119, 1
        %s965 = scalar_lea.sflag [#allocation4], %s964
        %s966 = sand.u32 %s119, 1
        %s967 = smul.addr %s966, 64
        %s968 = scalar_lea.vmem [#allocation7], %s967
        // Predicated region
        $region45: #{tpu_custom_call.1} parent=35 // pred_check
          %p969 = pneg %p129
        $region46: #{tpu_custom_call.1} parent=35 // pred_check_branch
          %971 = sbr.rel (%p969) target = $region48
        $region47: #{tpu_custom_call.1} parent=35 // pred_region
          %s972 = smul.u32 8, %s22
          %s974 = ssub.s32 1024, 1024
          %975 = vsyncadd %s965, %s974
          %s976 = smul.addr %s972, 128
          %s977 = scalar_lea.hbm %s4, %s976
          %s978 = sshll.u32 %s968, 4
          %s979 = int_to_ptr.vmem [resolvable:$true] %s978
          %984 = dma.vmem_to_hbm [thread:$0]  %s979, 1024, %s977, %s965, 128, 128, 8
        $region48: #{tpu_custom_call.1} parent=35 // pred_fallthru
          _
      $region36: #{tpu_custom_call.1} parent=5 // pred_fallthru
        _
      %p985 = scmp.le.s32.totalorder 2, %s17
      // Predicated region
      $region49: #{tpu_custom_call.1} parent=5 // pred_check
        %p986 = pneg %p985
      $region50: #{tpu_custom_call.1} parent=5 // pred_check_branch
        %988 = sbr.rel (%p986) target = $region52
      $region51: #{tpu_custom_call.1} parent=5 // pred_region
        %s989 = ssub.s32 %s17, 2
        // Predicated region
        $region53: #{tpu_custom_call.1} parent=51 // pred_check
          %p990 = pneg %p135
        $region54: #{tpu_custom_call.1} parent=51 // pred_check_branch
          %992 = sbr.rel (%p990) target = $region56
        $region55: #{tpu_custom_call.1} parent=51 // pred_region
          %s993 = sand.u32 %s120, 1
          %s994 = scalar_lea.sflag [#allocation4], %s993
          %s995 = sand.u32 %s120, 1
          %s996 = smul.addr %s995, 64
          %s997 = scalar_lea.vmem [#allocation7], %s996
          %998 = dma.done %s994, 1024
        $region56: #{tpu_custom_call.1} parent=51 // pred_fallthru
          _
      $region52: #{tpu_custom_call.1} parent=5 // pred_fallthru
        _
    $region6: #{tpu_custom_call.1} parent=1 // loop_footer
      %s21 = sadd.s32 1, %s17
    $region7: #{tpu_custom_call.1} parent=1 // loop_footer_branch
      %16 = sbr.rel target = $region3
    $region8: #{tpu_custom_call.1} parent=1 // loop_exit
      _
    %999 = vsyncpa [#allocation3], 1
    %s1000 = scalar_lea.sflag [#allocation3], 1
    %1001 = vsyncpa %s1000, 1
    %1002 = vsyncpa [#allocation6], 1
    %1003 = vsyncpa [#allocation4], 1
    %s1004 = scalar_lea.sflag [#allocation4], 1
    %1005 = vsyncpa %s1004, 1

</llo_original>
